<compile_context>
chip_gen: v5e
topology: v5e:2x2
jax: 0.10.0
libtpu: 0.0.40
codegen_flags: <defaults>
</compile_context>

<pallas_src>
import jax
import jax.numpy as jnp
from jax.experimental import pallas as pl
from jax.experimental.pallas import tpu as pltpu


def _round_up(x: int, m: int) -> int:
    return ((x + m - 1) // m) * m


def _stat_branch_kernel(ids_ref, emb_ref, w1_ref, b1_ref, w2_ref, b2_ref,
                        o_ref, acc_ref):
    # grid = (batch_blocks, vocab_blocks); vocab (axis 1) is the reduction axis.
    k = pl.program_id(1)
    tb, S = ids_ref.shape
    tv, _E = emb_ref.shape

    @pl.when(k == 0)
    def _init():
        acc_ref[...] = jnp.zeros_like(acc_ref)

    # Vocab ids covered by this embedding tile (lane axis = local vocab index).
    vocab_ids = k * tv + jax.lax.broadcasted_iota(jnp.int32, (1, tv), 1)

    # Token counts per (row, vocab-id-in-tile): one (tb, tv) VPU compare per
    # sequence position — never materializes an O(tb*S*tv) one-hot.
    # S is a small static value, so this loop unrolls at trace time; for long
    # sequences switch to lax.fori_loop(..., unroll=True).
    ids = ids_ref[...]                                   # (tb, S) int32
    counts = jnp.zeros((tb, tv), jnp.float32)
    for s in range(S):
        counts = counts + (ids[:, s:s + 1] == vocab_ids).astype(jnp.float32)

    # sum(embedding(ids)) restricted to this vocab tile, accumulated across
    # vocab tiles on the MXU with an f32 accumulator.
    acc_ref[...] += jnp.dot(counts, emb_ref[...],
                            preferred_element_type=jnp.float32)

    # Finalize on the last vocab tile: mean, fc1+ReLU, fc2+ReLU, store.
    @pl.when(k == pl.num_programs(1) - 1)
    def _finalize():
        avg = acc_ref[...] * (1.0 / S)                                   # (tb, E)
        h = jnp.dot(avg, w1_ref[...], preferred_element_type=jnp.float32)
        h = jnp.maximum(h + b1_ref[...], 0.0)                            # (tb, H)
        h = jnp.dot(h, w2_ref[...], preferred_element_type=jnp.float32)
        h = jnp.maximum(h + b2_ref[...], 0.0)                            # (tb, H)
        o_ref[...] = h.astype(o_ref.dtype)


def statistical_branch(input_ids, emb_table, w1, b1, w2, b2, *, tb=128, tv=512):
    B, S = input_ids.shape
    V, E = emb_table.shape
    E2, H = w1.shape
    assert E2 == E, "w1 must be stored (embed_dim, hidden_dim)"
    b1 = b1.reshape(1, H)
    b2 = b2.reshape(1, H)

    # --- choose tiles & pad to TPU-friendly multiples -------------------------
    tb = min(tb, _round_up(B, 8))          # batch tile (multiple of 8 sublanes)
    Bp = _round_up(B, tb)
    tv = min(tv, _round_up(V, 8))          # vocab tile (multiple of 8 sublanes)
    Vp = _round_up(V, tv)

    if Bp != B:
        input_ids = jnp.pad(input_ids, ((0, Bp - B), (0, 0)))     # id 0 is valid
    if Vp != V:
        emb_table = jnp.pad(emb_table, ((0, Vp - V), (0, 0)))     # zero rows, never hit

    grid = (Bp // tb, Vp // tv)

    # --- VMEM budget (double-buffered blocks + weights + accumulator) ---------
    itemsize = 4
    est = (2 * (tb * S + tv * E + tb * H) * itemsize          # pipelined ids/emb/out blocks
           + 2 * (E * H + H + H * H + H) * itemsize           # weight / bias blocks
           + tb * E * itemsize)                               # f32 accumulator scratch
    vmem_limit = int(min(32 * 1024 * 1024, max(16 * 1024 * 1024, 2 * est)))

    out = pl.pallas_call(
        _stat_branch_kernel,
        out_shape=jax.ShapeDtypeStruct((Bp, H), jnp.float32),
        grid_spec=pltpu.PrefetchScalarGridSpec(
            num_scalar_prefetch=0,
            grid=grid,
            in_specs=[
                pl.BlockSpec((tb, S), lambda i, k: (i, 0)),   # ids (per batch block)
                pl.BlockSpec((tv, E), lambda i, k: (k, 0)),   # emb tile (pipelined over vocab)
                pl.BlockSpec((E, H), lambda i, k: (0, 0)),    # w1
                pl.BlockSpec((1, H), lambda i, k: (0, 0)),    # b1
                pl.BlockSpec((H, H), lambda i, k: (0, 0)),    # w2
                pl.BlockSpec((1, H), lambda i, k: (0, 0)),    # b2
            ],
            out_specs=pl.BlockSpec((tb, H), lambda i, k: (i, 0)),
            scratch_shapes=[pltpu.VMEM((tb, E), jnp.float32)],
        ),
        compiler_params=pltpu.CompilerParams(
            dimension_semantics=("parallel", "arbitrary"),
            vmem_limit_bytes=vmem_limit,
        ),
    )(input_ids, emb_table, w1, b1, w2, b2)

    return out[:B]


def _reference(input_ids, emb_table, w1, b1, w2, b2):
    x = jnp.take(emb_table, input_ids, axis=0)        # (B, S, E)
    avg = jnp.mean(x, axis=1)                         # (B, E)
    h = jax.nn.relu(avg @ w1 + b1.reshape(1, -1))
    h = jax.nn.relu(h @ w2 + b2.reshape(1, -1))
    return h


if __name__ == "__main__":
    # Small, deterministic synthetic setup (lane-friendly E/H = 128).
    vocab_size, embed_dim, hidden_dim = 256, 128, 128
    batch, seq = 8, 16

    key = jax.random.PRNGKey(0)
    k_ids, k_emb, k_w1, k_b1, k_w2, k_b2 = jax.random.split(key, 6)

    input_ids = jax.random.randint(k_ids, (batch, seq), 0, vocab_size, dtype=jnp.int32)

    # nn.Embedding init ~ N(0, 1)
    emb_table = jax.random.normal(k_emb, (vocab_size, embed_dim), dtype=jnp.float32)

    # nn.Linear init ~ U(-1/sqrt(fan_in), 1/sqrt(fan_in)); stored transposed (in, out).
    lim1 = 1.0 / jnp.sqrt(embed_dim)
    w1 = jax.random.uniform(k_w1, (embed_dim, hidden_dim), jnp.float32, -lim1, lim1)
    b1 = jax.random.uniform(k_b1, (1, hidden_dim), jnp.float32, -lim1, lim1)
    lim2 = 1.0 / jnp.sqrt(hidden_dim)
    w2 = jax.random.uniform(k_w2, (hidden_dim, hidden_dim), jnp.float32, -lim2, lim2)
    b2 = jax.random.uniform(k_b2, (1, hidden_dim), jnp.float32, -lim2, lim2)

    out = statistical_branch(input_ids, emb_table, w1, b1, w2, b2)
    out = jax.block_until_ready(out)

    ref = _reference(input_ids, emb_table, w1, b1, w2, b2)
    assert out.shape == (batch, hidden_dim)
    assert jnp.allclose(out, ref, atol=1e-4, rtol=1e-4), "mismatch vs. reference"

    print("KERNEL_OK")
</pallas_src>

<mosaic_0001>
module attributes {stable_mosaic.version = 11 : i64} {
  func.func @_stat_branch_kernel(%arg0: i32, %arg1: i32, %arg2: memref<8x16xi32, #tpu.memory_space<vmem>>, %arg3: memref<256x128xf32, #tpu.memory_space<vmem>>, %arg4: memref<128x128xf32, #tpu.memory_space<vmem>>, %arg5: memref<1x128xf32, #tpu.memory_space<vmem>>, %arg6: memref<128x128xf32, #tpu.memory_space<vmem>>, %arg7: memref<1x128xf32, #tpu.memory_space<vmem>>, %arg8: memref<8x128xf32, #tpu.memory_space<vmem>>, %arg9: memref<8x128xf32, #tpu.memory_space<vmem>>) attributes {dimension_semantics = [#tpu.dimension_semantics<parallel>, #tpu.dimension_semantics<arbitrary>], iteration_bounds = array<i64: 1, 1>, scalar_prefetch = 0 : i64, scratch_operands = 1 : i64, tpu.core_type = #tpu.core_type<tc>, window_params = [{transform_indices = @transform_0, window_bounds = array<i64: 8, 16>}, {transform_indices = @transform_1, window_bounds = array<i64: 256, 128>}, {pipeline_mode = #tpu.pipeline_mode<synchronous>, transform_indices = @transform_2, window_bounds = array<i64: 128, 128>}, {pipeline_mode = #tpu.pipeline_mode<synchronous>, transform_indices = @transform_3, window_bounds = array<i64: 1, 128>}, {pipeline_mode = #tpu.pipeline_mode<synchronous>, transform_indices = @transform_4, window_bounds = array<i64: 128, 128>}, {pipeline_mode = #tpu.pipeline_mode<synchronous>, transform_indices = @transform_5, window_bounds = array<i64: 1, 128>}, {transform_indices = @transform_6, window_bounds = array<i64: 8, 128>}]} {
    %c0_i32 = arith.constant 0 : i32
    %0 = arith.cmpi eq, %arg1, %c0_i32 : i32
    %1 = arith.extui %0 : i1 to i32
    %c0_i32_0 = arith.constant 0 : i32
    %2 = arith.cmpi ne, %1, %c0_i32_0 : i32
    scf.if %2 {
      %cst_11 = arith.constant 0.000000e+00 : f32
      %129 = vector.broadcast %cst_11 : f32 to vector<8x128xf32>
      %c0_12 = arith.constant 0 : index
      %c0_13 = arith.constant 0 : index
      %130 = vector.load %arg9[%c0_12, %c0_13] : memref<8x128xf32, #tpu.memory_space<vmem>>, vector<8x128xf32>
      tpu.vector_store %arg9[%c0_12, %c0_13], %129 {strides = array<i32>} : memref<8x128xf32, #tpu.memory_space<vmem>>, vector<8x128xf32>,
    } else {
    }
    %c256_i32 = arith.constant 256 : i32
    %3 = arith.muli %arg1, %c256_i32 : i32
    %4 = tpu.iota {dimensions = array<i32: 1>} : vector<1x256xi32>
    %5 = vector.broadcast %3 : i32 to vector<1x256xi32>
    %6 = arith.addi %5, %4 : vector<1x256xi32>
    %c0 = arith.constant 0 : index
    %c0_1 = arith.constant 0 : index
    %7 = vector.load %arg2[%c0, %c0_1] : memref<8x16xi32, #tpu.memory_space<vmem>>, vector<8x16xi32>
    %cst = arith.constant 0.000000e+00 : f32
    %8 = vector.broadcast %cst : f32 to vector<8x256xf32>
    %9 = vector.extract_strided_slice %7 {offsets = [0, 0], sizes = [8, 1], strides = [1, 1]} : vector<8x16xi32> to vector<8x1xi32>
    %10 = vector.broadcast %9 : vector<8x1xi32> to vector<8x256xi32>
    %11 = vector.broadcast %6 : vector<1x256xi32> to vector<8x256xi32>
    %12 = arith.cmpi eq, %10, %11 : vector<8x256xi32>
    %13 = arith.extui %12 : vector<8x256xi1> to vector<8x256xi32>
    %14 = arith.sitofp %13 : vector<8x256xi32> to vector<8x256xf32>
    %15 = arith.addf %8, %14 : vector<8x256xf32>
    %16 = vector.extract_strided_slice %7 {offsets = [0, 1], sizes = [8, 1], strides = [1, 1]} : vector<8x16xi32> to vector<8x1xi32>
    %17 = vector.broadcast %16 : vector<8x1xi32> to vector<8x256xi32>
    %18 = vector.broadcast %6 : vector<1x256xi32> to vector<8x256xi32>
    %19 = arith.cmpi eq, %17, %18 : vector<8x256xi32>
    %20 = arith.extui %19 : vector<8x256xi1> to vector<8x256xi32>
    %21 = arith.sitofp %20 : vector<8x256xi32> to vector<8x256xf32>
    %22 = arith.addf %15, %21 : vector<8x256xf32>
    %23 = vector.extract_strided_slice %7 {offsets = [0, 2], sizes = [8, 1], strides = [1, 1]} : vector<8x16xi32> to vector<8x1xi32>
    %24 = vector.broadcast %23 : vector<8x1xi32> to vector<8x256xi32>
    %25 = vector.broadcast %6 : vector<1x256xi32> to vector<8x256xi32>
    %26 = arith.cmpi eq, %24, %25 : vector<8x256xi32>
    %27 = arith.extui %26 : vector<8x256xi1> to vector<8x256xi32>
    %28 = arith.sitofp %27 : vector<8x256xi32> to vector<8x256xf32>
    %29 = arith.addf %22, %28 : vector<8x256xf32>
    %30 = vector.extract_strided_slice %7 {offsets = [0, 3], sizes = [8, 1], strides = [1, 1]} : vector<8x16xi32> to vector<8x1xi32>
    %31 = vector.broadcast %30 : vector<8x1xi32> to vector<8x256xi32>
    %32 = vector.broadcast %6 : vector<1x256xi32> to vector<8x256xi32>
    %33 = arith.cmpi eq, %31, %32 : vector<8x256xi32>
    %34 = arith.extui %33 : vector<8x256xi1> to vector<8x256xi32>
    %35 = arith.sitofp %34 : vector<8x256xi32> to vector<8x256xf32>
    %36 = arith.addf %29, %35 : vector<8x256xf32>
    %37 = vector.extract_strided_slice %7 {offsets = [0, 4], sizes = [8, 1], strides = [1, 1]} : vector<8x16xi32> to vector<8x1xi32>
    %38 = vector.broadcast %37 : vector<8x1xi32> to vector<8x256xi32>
    %39 = vector.broadcast %6 : vector<1x256xi32> to vector<8x256xi32>
    %40 = arith.cmpi eq, %38, %39 : vector<8x256xi32>
    %41 = arith.extui %40 : vector<8x256xi1> to vector<8x256xi32>
    %42 = arith.sitofp %41 : vector<8x256xi32> to vector<8x256xf32>
    %43 = arith.addf %36, %42 : vector<8x256xf32>
    %44 = vector.extract_strided_slice %7 {offsets = [0, 5], sizes = [8, 1], strides = [1, 1]} : vector<8x16xi32> to vector<8x1xi32>
    %45 = vector.broadcast %44 : vector<8x1xi32> to vector<8x256xi32>
    %46 = vector.broadcast %6 : vector<1x256xi32> to vector<8x256xi32>
    %47 = arith.cmpi eq, %45, %46 : vector<8x256xi32>
    %48 = arith.extui %47 : vector<8x256xi1> to vector<8x256xi32>
    %49 = arith.sitofp %48 : vector<8x256xi32> to vector<8x256xf32>
    %50 = arith.addf %43, %49 : vector<8x256xf32>
    %51 = vector.extract_strided_slice %7 {offsets = [0, 6], sizes = [8, 1], strides = [1, 1]} : vector<8x16xi32> to vector<8x1xi32>
    %52 = vector.broadcast %51 : vector<8x1xi32> to vector<8x256xi32>
    %53 = vector.broadcast %6 : vector<1x256xi32> to vector<8x256xi32>
    %54 = arith.cmpi eq, %52, %53 : vector<8x256xi32>
    %55 = arith.extui %54 : vector<8x256xi1> to vector<8x256xi32>
    %56 = arith.sitofp %55 : vector<8x256xi32> to vector<8x256xf32>
    %57 = arith.addf %50, %56 : vector<8x256xf32>
    %58 = vector.extract_strided_slice %7 {offsets = [0, 7], sizes = [8, 1], strides = [1, 1]} : vector<8x16xi32> to vector<8x1xi32>
    %59 = vector.broadcast %58 : vector<8x1xi32> to vector<8x256xi32>
    %60 = vector.broadcast %6 : vector<1x256xi32> to vector<8x256xi32>
    %61 = arith.cmpi eq, %59, %60 : vector<8x256xi32>
    %62 = arith.extui %61 : vector<8x256xi1> to vector<8x256xi32>
    %63 = arith.sitofp %62 : vector<8x256xi32> to vector<8x256xf32>
    %64 = arith.addf %57, %63 : vector<8x256xf32>
    %65 = vector.extract_strided_slice %7 {offsets = [0, 8], sizes = [8, 1], strides = [1, 1]} : vector<8x16xi32> to vector<8x1xi32>
    %66 = vector.broadcast %65 : vector<8x1xi32> to vector<8x256xi32>
    %67 = vector.broadcast %6 : vector<1x256xi32> to vector<8x256xi32>
    %68 = arith.cmpi eq, %66, %67 : vector<8x256xi32>
    %69 = arith.extui %68 : vector<8x256xi1> to vector<8x256xi32>
    %70 = arith.sitofp %69 : vector<8x256xi32> to vector<8x256xf32>
    %71 = arith.addf %64, %70 : vector<8x256xf32>
    %72 = vector.extract_strided_slice %7 {offsets = [0, 9], sizes = [8, 1], strides = [1, 1]} : vector<8x16xi32> to vector<8x1xi32>
    %73 = vector.broadcast %72 : vector<8x1xi32> to vector<8x256xi32>
    %74 = vector.broadcast %6 : vector<1x256xi32> to vector<8x256xi32>
    %75 = arith.cmpi eq, %73, %74 : vector<8x256xi32>
    %76 = arith.extui %75 : vector<8x256xi1> to vector<8x256xi32>
    %77 = arith.sitofp %76 : vector<8x256xi32> to vector<8x256xf32>
    %78 = arith.addf %71, %77 : vector<8x256xf32>
    %79 = vector.extract_strided_slice %7 {offsets = [0, 10], sizes = [8, 1], strides = [1, 1]} : vector<8x16xi32> to vector<8x1xi32>
    %80 = vector.broadcast %79 : vector<8x1xi32> to vector<8x256xi32>
    %81 = vector.broadcast %6 : vector<1x256xi32> to vector<8x256xi32>
    %82 = arith.cmpi eq, %80, %81 : vector<8x256xi32>
    %83 = arith.extui %82 : vector<8x256xi1> to vector<8x256xi32>
    %84 = arith.sitofp %83 : vector<8x256xi32> to vector<8x256xf32>
    %85 = arith.addf %78, %84 : vector<8x256xf32>
    %86 = vector.extract_strided_slice %7 {offsets = [0, 11], sizes = [8, 1], strides = [1, 1]} : vector<8x16xi32> to vector<8x1xi32>
    %87 = vector.broadcast %86 : vector<8x1xi32> to vector<8x256xi32>
    %88 = vector.broadcast %6 : vector<1x256xi32> to vector<8x256xi32>
    %89 = arith.cmpi eq, %87, %88 : vector<8x256xi32>
    %90 = arith.extui %89 : vector<8x256xi1> to vector<8x256xi32>
    %91 = arith.sitofp %90 : vector<8x256xi32> to vector<8x256xf32>
    %92 = arith.addf %85, %91 : vector<8x256xf32>
    %93 = vector.extract_strided_slice %7 {offsets = [0, 12], sizes = [8, 1], strides = [1, 1]} : vector<8x16xi32> to vector<8x1xi32>
    %94 = vector.broadcast %93 : vector<8x1xi32> to vector<8x256xi32>
    %95 = vector.broadcast %6 : vector<1x256xi32> to vector<8x256xi32>
    %96 = arith.cmpi eq, %94, %95 : vector<8x256xi32>
    %97 = arith.extui %96 : vector<8x256xi1> to vector<8x256xi32>
    %98 = arith.sitofp %97 : vector<8x256xi32> to vector<8x256xf32>
    %99 = arith.addf %92, %98 : vector<8x256xf32>
    %100 = vector.extract_strided_slice %7 {offsets = [0, 13], sizes = [8, 1], strides = [1, 1]} : vector<8x16xi32> to vector<8x1xi32>
    %101 = vector.broadcast %100 : vector<8x1xi32> to vector<8x256xi32>
    %102 = vector.broadcast %6 : vector<1x256xi32> to vector<8x256xi32>
    %103 = arith.cmpi eq, %101, %102 : vector<8x256xi32>
    %104 = arith.extui %103 : vector<8x256xi1> to vector<8x256xi32>
    %105 = arith.sitofp %104 : vector<8x256xi32> to vector<8x256xf32>
    %106 = arith.addf %99, %105 : vector<8x256xf32>
    %107 = vector.extract_strided_slice %7 {offsets = [0, 14], sizes = [8, 1], strides = [1, 1]} : vector<8x16xi32> to vector<8x1xi32>
    %108 = vector.broadcast %107 : vector<8x1xi32> to vector<8x256xi32>
    %109 = vector.broadcast %6 : vector<1x256xi32> to vector<8x256xi32>
    %110 = arith.cmpi eq, %108, %109 : vector<8x256xi32>
    %111 = arith.extui %110 : vector<8x256xi1> to vector<8x256xi32>
    %112 = arith.sitofp %111 : vector<8x256xi32> to vector<8x256xf32>
    %113 = arith.addf %106, %112 : vector<8x256xf32>
    %114 = vector.extract_strided_slice %7 {offsets = [0, 15], sizes = [8, 1], strides = [1, 1]} : vector<8x16xi32> to vector<8x1xi32>
    %115 = vector.broadcast %114 : vector<8x1xi32> to vector<8x256xi32>
    %116 = vector.broadcast %6 : vector<1x256xi32> to vector<8x256xi32>
    %117 = arith.cmpi eq, %115, %116 : vector<8x256xi32>
    %118 = arith.extui %117 : vector<8x256xi1> to vector<8x256xi32>
    %119 = arith.sitofp %118 : vector<8x256xi32> to vector<8x256xf32>
    %120 = arith.addf %113, %119 : vector<8x256xf32>
    %c0_2 = arith.constant 0 : index
    %c0_3 = arith.constant 0 : index
    %121 = vector.load %arg9[%c0_2, %c0_3] : memref<8x128xf32, #tpu.memory_space<vmem>>, vector<8x128xf32>
    %c0_4 = arith.constant 0 : index
    %c0_5 = arith.constant 0 : index
    %122 = vector.load %arg3[%c0_4, %c0_5] : memref<256x128xf32, #tpu.memory_space<vmem>>, vector<256x128xf32>
    %cst_6 = arith.constant dense<0.000000e+00> : vector<8x128xf32>
    %123 = tpu.matmul %120, %122, %cst_6 {dimension_numbers = #tpu.dot_dimension_numbers<[1], [0], [0], [1], [0, 0, 1, 1], [], []>} : vector<8x256xf32>, vector<256x128xf32>, vector<8x128xf32> -> vector<8x128xf32>
    %124 = arith.addf %121, %123 : vector<8x128xf32>
    %c0_7 = arith.constant 0 : index
    %c0_8 = arith.constant 0 : index
    %125 = vector.load %arg9[%c0_7, %c0_8] : memref<8x128xf32, #tpu.memory_space<vmem>>, vector<8x128xf32>
    tpu.vector_store %arg9[%c0_7, %c0_8], %124 {strides = array<i32>} : memref<8x128xf32, #tpu.memory_space<vmem>>, vector<8x128xf32>,
    %c0_i32_9 = arith.constant 0 : i32
    %126 = arith.cmpi eq, %arg1, %c0_i32_9 : i32
    %127 = arith.extui %126 : i1 to i32
    %c0_i32_10 = arith.constant 0 : i32
    %128 = arith.cmpi ne, %127, %c0_i32_10 : i32
    scf.if %128 {
      %c0_11 = arith.constant 0 : index
      %c0_12 = arith.constant 0 : index
      %129 = vector.load %arg9[%c0_11, %c0_12] : memref<8x128xf32, #tpu.memory_space<vmem>>, vector<8x128xf32>
      %cst_13 = arith.constant 6.250000e-02 : f32
      %130 = vector.broadcast %cst_13 : f32 to vector<8x128xf32>
      %131 = arith.mulf %129, %130 : vector<8x128xf32>
      %c0_14 = arith.constant 0 : index
      %c0_15 = arith.constant 0 : index
      %132 = vector.load %arg4[%c0_14, %c0_15] : memref<128x128xf32, #tpu.memory_space<vmem>>, vector<128x128xf32>
      %cst_16 = arith.constant dense<0.000000e+00> : vector<8x128xf32>
      %133 = tpu.matmul %131, %132, %cst_16 {dimension_numbers = #tpu.dot_dimension_numbers<[1], [0], [0], [1], [0, 0, 1, 1], [], []>} : vector<8x128xf32>, vector<128x128xf32>, vector<8x128xf32> -> vector<8x128xf32>
      %c0_17 = arith.constant 0 : index
      %c0_18 = arith.constant 0 : index
      %134 = vector.load %arg5[%c0_17, %c0_18] : memref<1x128xf32, #tpu.memory_space<vmem>>, vector<1x128xf32>
      %135 = vector.broadcast %134 : vector<1x128xf32> to vector<8x128xf32>
      %136 = arith.addf %133, %135 : vector<8x128xf32>
      %cst_19 = arith.constant 0.000000e+00 : f32
      %137 = vector.broadcast %cst_19 : f32 to vector<8x128xf32>
      %138 = arith.maximumf %136, %137 : vector<8x128xf32>
      %c0_20 = arith.constant 0 : index
      %c0_21 = arith.constant 0 : index
      %139 = vector.load %arg6[%c0_20, %c0_21] : memref<128x128xf32, #tpu.memory_space<vmem>>, vector<128x128xf32>
      %cst_22 = arith.constant dense<0.000000e+00> : vector<8x128xf32>
      %140 = tpu.matmul %138, %139, %cst_22 {dimension_numbers = #tpu.dot_dimension_numbers<[1], [0], [0], [1], [0, 0, 1, 1], [], []>} : vector<8x128xf32>, vector<128x128xf32>, vector<8x128xf32> -> vector<8x128xf32>
      %c0_23 = arith.constant 0 : index
      %c0_24 = arith.constant 0 : index
      %141 = vector.load %arg7[%c0_23, %c0_24] : memref<1x128xf32, #tpu.memory_space<vmem>>, vector<1x128xf32>
      %142 = vector.broadcast %141 : vector<1x128xf32> to vector<8x128xf32>
      %143 = arith.addf %140, %142 : vector<8x128xf32>
      %cst_25 = arith.constant 0.000000e+00 : f32
      %144 = vector.broadcast %cst_25 : f32 to vector<8x128xf32>
      %145 = arith.maximumf %143, %144 : vector<8x128xf32>
      %c0_26 = arith.constant 0 : index
      %c0_27 = arith.constant 0 : index
      %146 = vector.load %arg8[%c0_26, %c0_27] : memref<8x128xf32, #tpu.memory_space<vmem>>, vector<8x128xf32>
      tpu.vector_store %arg8[%c0_26, %c0_27], %145 {strides = array<i32>} : memref<8x128xf32, #tpu.memory_space<vmem>>, vector<8x128xf32>,
    } else {
    }
    return
  }
  func.func @transform_0(%arg0: i32, %arg1: i32) -> (i32, i32) {
    %c0_i32 = arith.constant 0 : i32
    %c0_i32_0 = arith.constant 0 : i32
    return %arg0, %c0_i32 : i32, i32
  }
  func.func @transform_1(%arg0: i32, %arg1: i32) -> (i32, i32) {
    %c0_i32 = arith.constant 0 : i32
    %c0_i32_0 = arith.constant 0 : i32
    return %arg1, %c0_i32 : i32, i32
  }
  func.func @transform_2(%arg0: i32, %arg1: i32) -> (i32, i32) {
    %c0_i32 = arith.constant 0 : i32
    %c0_i32_0 = arith.constant 0 : i32
    %c0_i32_1 = arith.constant 0 : i32
    return %c0_i32, %c0_i32_0 : i32, i32
  }
  func.func @transform_3(%arg0: i32, %arg1: i32) -> (i32, i32) {
    %c0_i32 = arith.constant 0 : i32
    %c0_i32_0 = arith.constant 0 : i32
    %c0_i32_1 = arith.constant 0 : i32
    return %c0_i32, %c0_i32_0 : i32, i32
  }
  func.func @transform_4(%arg0: i32, %arg1: i32) -> (i32, i32) {
    %c0_i32 = arith.constant 0 : i32
    %c0_i32_0 = arith.constant 0 : i32
    %c0_i32_1 = arith.constant 0 : i32
    return %c0_i32, %c0_i32_0 : i32, i32
  }
  func.func @transform_5(%arg0: i32, %arg1: i32) -> (i32, i32) {
    %c0_i32 = arith.constant 0 : i32
    %c0_i32_0 = arith.constant 0 : i32
    %c0_i32_1 = arith.constant 0 : i32
    return %c0_i32, %c0_i32_0 : i32, i32
  }
  func.func @transform_6(%arg0: i32, %arg1: i32) -> (i32, i32) {
    %c0_i32 = arith.constant 0 : i32
    %c0_i32_0 = arith.constant 0 : i32
    return %arg0, %c0_i32 : i32, i32
  }
}

</mosaic_0001>

<llo_original>
// kernel: tpu_custom_call.1
$region0: #{tpu_custom_call.1}
  #allocation0 [shape = 'u32[]', space=smem, size = 0x4, offset = 0x4, fixed_abs, tag = 'smem constant byte address 0x4 - core index']
  #allocation1 [shape = 'u32[72,128]{1,0:T(1,128)}', space=vmem, size = 0x9000, scoped, tag = 'internal scratch']
  #allocation2 [shape = 'f32[8,128]{1,0:T(8,128)}', space=vmem, size = 0x1000, scoped, tag = 'scratch operand']
  %s0 = inlined_call_operand.hbm [shape: s32[8,16], index: 0, kind: input, shape index: {}]
  %s1 = inlined_call_operand.hbm [shape: f32[256,128], index: 1, kind: input, shape index: {}]
  %s2 = inlined_call_operand.hbm [shape: f32[128,128], index: 2, kind: input, shape index: {}]
  %s3 = inlined_call_operand.vmem [shape: f32[1,128], index: 3, kind: input, shape index: {}]
  %s4 = inlined_call_operand.hbm [shape: f32[128,128], index: 4, kind: input, shape index: {}]
  %s5 = inlined_call_operand.vmem [shape: f32[1,128], index: 5, kind: input, shape index: {}]
  %s6 = inlined_call_operand.hbm [shape: f32[8,128], index: 6, kind: output, shape index: {}]
  %s7 = sld [smem:[#allocation0]]
  $region58: #{tpu_custom_call.1} parent=0
    _
  %s9 = ssub.s32 1, %s7
  %s10 = scalar_select 0, %s9, %s7
  $region1: #{tpu_custom_call.1} parent=0
    #allocation3 [shape = 'u8[4096]{0}', space=vmem, size = 0x1000, scoped, tag = 'input window, operand 0, single buffered']
    #allocation4 [shape = 's32[1]{0}', space=sflag, size = 0x4, scoped, tag = 'scoped memory for tpu_custom_call.1']
    #allocation5 [shape = 's32[1]{0}', space=sflag, size = 0x4, scoped, tag = 'scoped memory for tpu_custom_call.1']
    #allocation6 [shape = 'u8[131072]{0}', space=vmem, size = 0x20000, scoped, tag = 'input window, operand 1, single buffered']
    #allocation7 [shape = 's32[1]{0}', space=sflag, size = 0x4, scoped, tag = 'scoped memory for tpu_custom_call.1']
    #allocation8 [shape = 'u8[65536]{0}', space=vmem, size = 0x10000, scoped, tag = 'input window, operand 2, single buffered']
    #allocation9 [shape = 'u8[65536]{0}', space=vmem, size = 0x10000, scoped, tag = 'input window, operand 4, single buffered']
    #allocation10 [shape = 's32[1]{0}', space=sflag, size = 0x4, scoped, tag = 'scoped memory for tpu_custom_call.1']
    #allocation11 [shape = 'u8[4096]{0}', space=vmem, size = 0x1000, scoped, tag = 'output window, operand 0, single buffered']
    %11 = vsyncpa [#allocation4], 0
    %12 = vsyncpa [#allocation7], 0
    %13 = vsyncpa [#allocation10], 0
    %14 = vsyncpa [#allocation5], 0
    // Predicated region
    $region2: #{tpu_custom_call.1} parent=1 // pred_check
      _
    $region3: #{tpu_custom_call.1} parent=1 // pred_check_branch
      %16 = sbr.rel (0) target = $region5
    $region4: #{tpu_custom_call.1} parent=1 // pred_region
      %18 = vsyncadd [#allocation4], 0
      %s20 = sshll.u32 %s0, 4
      %s21 = int_to_ptr.hbm [resolvable:$true] %s20
      %s22 = sshll.u32 [#allocation3], 4
      %s23 = int_to_ptr.vmem [resolvable:$true] %s22
      %25 = dma.hbm_to_vmem [thread:$0]  %s21, 128, %s23, [#allocation4]
    $region5: #{tpu_custom_call.1} parent=1 // pred_fallthru
      _
    // Predicated region
    $region6: #{tpu_custom_call.1} parent=1 // pred_check
      _
    $region7: #{tpu_custom_call.1} parent=1 // pred_check_branch
      %27 = sbr.rel (0) target = $region9
    $region8: #{tpu_custom_call.1} parent=1 // pred_region
      %29 = vsyncadd [#allocation7], 0
      %s30 = sshll.u32 %s1, 4
      %s31 = int_to_ptr.hbm [resolvable:$true] %s30
      %s32 = sshll.u32 [#allocation6], 4
      %s33 = int_to_ptr.vmem [resolvable:$true] %s32
      %38 = dma.hbm_to_vmem [thread:$0]  %s31, 4096, %s33, [#allocation7], 128, 128, 8
    $region9: #{tpu_custom_call.1} parent=1 // pred_fallthru
      _
    // Predicated region
    $region10: #{tpu_custom_call.1} parent=1 // pred_check
      _
    $region11: #{tpu_custom_call.1} parent=1 // pred_check_branch
      %40 = sbr.rel (0) target = $region13
    $region12: #{tpu_custom_call.1} parent=1 // pred_region
      %42 = vsyncadd [#allocation7], 0
      %s43 = sshll.u32 %s2, 4
      %s44 = int_to_ptr.hbm [resolvable:$true] %s43
      %s45 = sshll.u32 [#allocation8], 4
      %s46 = int_to_ptr.vmem [resolvable:$true] %s45
      %51 = dma.hbm_to_vmem [thread:$0]  %s44, 2048, %s46, [#allocation7], 128, 128, 8
    $region13: #{tpu_custom_call.1} parent=1 // pred_fallthru
      _
    // Predicated region
    $region14: #{tpu_custom_call.1} parent=1 // pred_check
      _
    $region15: #{tpu_custom_call.1} parent=1 // pred_check_branch
      %53 = sbr.rel (0) target = $region17
    $region16: #{tpu_custom_call.1} parent=1 // pred_region
      _
    $region17: #{tpu_custom_call.1} parent=1 // pred_fallthru
      _
    // Predicated region
    $region18: #{tpu_custom_call.1} parent=1 // pred_check
      _
    $region19: #{tpu_custom_call.1} parent=1 // pred_check_branch
      %55 = sbr.rel (0) target = $region21
    $region20: #{tpu_custom_call.1} parent=1 // pred_region
      %57 = vsyncadd [#allocation10], 0
      %s58 = sshll.u32 %s4, 4
      %s59 = int_to_ptr.hbm [resolvable:$true] %s58
      %s60 = sshll.u32 [#allocation9], 4
      %s61 = int_to_ptr.vmem [resolvable:$true] %s60
      %66 = dma.hbm_to_vmem [thread:$0]  %s59, 2048, %s61, [#allocation10], 128, 128, 8
    $region21: #{tpu_custom_call.1} parent=1 // pred_fallthru
      _
    // Predicated region
    $region22: #{tpu_custom_call.1} parent=1 // pred_check
      _
    $region23: #{tpu_custom_call.1} parent=1 // pred_check_branch
      %68 = sbr.rel (0) target = $region25
    $region24: #{tpu_custom_call.1} parent=1 // pred_region
      _
    $region25: #{tpu_custom_call.1} parent=1 // pred_fallthru
      _
    // Predicated region
    $region26: #{tpu_custom_call.1} parent=1 // pred_check
      _
    $region27: #{tpu_custom_call.1} parent=1 // pred_check_branch
      %70 = sbr.rel (0) target = $region29
    $region28: #{tpu_custom_call.1} parent=1 // pred_region
      %72 = dma.done [#allocation4], 128
    $region29: #{tpu_custom_call.1} parent=1 // pred_fallthru
      _
    // Predicated region
    $region30: #{tpu_custom_call.1} parent=1 // pred_check
      _
    $region31: #{tpu_custom_call.1} parent=1 // pred_check_branch
      %74 = sbr.rel (0) target = $region33
    $region32: #{tpu_custom_call.1} parent=1 // pred_region
      %76 = dma.done [#allocation7], 4096
    $region33: #{tpu_custom_call.1} parent=1 // pred_fallthru
      _
    // Predicated region
    $region34: #{tpu_custom_call.1} parent=1 // pred_check
      _
    $region35: #{tpu_custom_call.1} parent=1 // pred_check_branch
      %78 = sbr.rel (0) target = $region37
    $region36: #{tpu_custom_call.1} parent=1 // pred_region
      %80 = dma.done [#allocation7], 2048
    $region37: #{tpu_custom_call.1} parent=1 // pred_fallthru
      _
    // Predicated region
    $region38: #{tpu_custom_call.1} parent=1 // pred_check
      _
    $region39: #{tpu_custom_call.1} parent=1 // pred_check_branch
      %82 = sbr.rel (0) target = $region41
    $region40: #{tpu_custom_call.1} parent=1 // pred_region
      %84 = dma.done [#allocation10], 2048
    $region41: #{tpu_custom_call.1} parent=1 // pred_fallthru
      _
    %p85 = scmp.eq.s32.totalorder 0, 0
    // Predicated region
    $region42: #{tpu_custom_call.1} parent=1 // pred_check
      %p86 = pneg %p85
    $region43: #{tpu_custom_call.1} parent=1 // pred_check_branch
      %88 = sbr.rel (%p86) target = $region45
    $region44: #{tpu_custom_call.1} parent=1 // pred_region
      %89 = vst [vmem:[#allocation2] sm:$0xff] 0.0
    $region45: #{tpu_custom_call.1} parent=1 // pred_fallthru
      _
    %s90 = smul.u32 0, 256
    %v91 = vlaneseq
    %v92 = vand.u32 %v91, 127
    %v93 = vadd.s32 %v92, 128
    %v94 = vstv %s90
    %v95 = vadd.s32 %v94, %v92
    %v96 = vadd.s32 %v94, %v93
    %v97 = vld [vmem:[#allocation3] sm:$0xff]
    %98 = vset.pattern.permute.xlu0 0
    %99 = vperm.xlu0 %98, %v97
    %v100 = vpop.permute.xlu0 %99
    %vm101 = vcmp.eq.s32.totalorder %v100, %v95
    %vm102 = vcmp.eq.s32.totalorder %v100, %v96
    %v103 = vsel %vm101, 1, 0
    %v104 = vsel %vm102, 1, 0
    %v105 = vcvt.s32.f32 %v103
    %v106 = vcvt.s32.f32 %v104
    %v107 = vadd.f32 %v105, 0.0
    %v108 = vadd.f32 %v106, 0.0
    %109 = vset.pattern.permute.xlu0 1
    %110 = vperm.xlu0 %109, %v97
    %v111 = vpop.permute.xlu0 %110
    %vm112 = vcmp.eq.s32.totalorder %v111, %v95
    %vm113 = vcmp.eq.s32.totalorder %v111, %v96
    %v114 = vsel %vm112, 1, 0
    %v115 = vsel %vm113, 1, 0
    %v116 = vcvt.s32.f32 %v114
    %v117 = vcvt.s32.f32 %v115
    %v118 = vadd.f32 %v107, %v116
    %v119 = vadd.f32 %v108, %v117
    %120 = vset.pattern.permute.xlu0 2
    %121 = vperm.xlu0 %120, %v97
    %v122 = vpop.permute.xlu0 %121
    %vm123 = vcmp.eq.s32.totalorder %v122, %v95
    %vm124 = vcmp.eq.s32.totalorder %v122, %v96
    %v125 = vsel %vm123, 1, 0
    %v126 = vsel %vm124, 1, 0
    %v127 = vcvt.s32.f32 %v125
    %v128 = vcvt.s32.f32 %v126
    %v129 = vadd.f32 %v118, %v127
    %v130 = vadd.f32 %v119, %v128
    %131 = vset.pattern.permute.xlu0 3
    %132 = vperm.xlu0 %131, %v97
    %v133 = vpop.permute.xlu0 %132
    %vm134 = vcmp.eq.s32.totalorder %v133, %v95
    %vm135 = vcmp.eq.s32.totalorder %v133, %v96
    %v136 = vsel %vm134, 1, 0
    %v137 = vsel %vm135, 1, 0
    %v138 = vcvt.s32.f32 %v136
    %v139 = vcvt.s32.f32 %v137
    %v140 = vadd.f32 %v129, %v138
    %v141 = vadd.f32 %v130, %v139
    %142 = vset.pattern.permute.xlu0 4
    %143 = vperm.xlu0 %142, %v97
    %v144 = vpop.permute.xlu0 %143
    %vm145 = vcmp.eq.s32.totalorder %v144, %v95
    %vm146 = vcmp.eq.s32.totalorder %v144, %v96
    %v147 = vsel %vm145, 1, 0
    %v148 = vsel %vm146, 1, 0
    %v149 = vcvt.s32.f32 %v147
    %v150 = vcvt.s32.f32 %v148
    %v151 = vadd.f32 %v140, %v149
    %v152 = vadd.f32 %v141, %v150
    %153 = vset.pattern.permute.xlu0 5
    %154 = vperm.xlu0 %153, %v97
    %v155 = vpop.permute.xlu0 %154
    %vm156 = vcmp.eq.s32.totalorder %v155, %v95
    %vm157 = vcmp.eq.s32.totalorder %v155, %v96
    %v158 = vsel %vm156, 1, 0
    %v159 = vsel %vm157, 1, 0
    %v160 = vcvt.s32.f32 %v158
    %v161 = vcvt.s32.f32 %v159
    %v162 = vadd.f32 %v151, %v160
    %v163 = vadd.f32 %v152, %v161
    %164 = vset.pattern.permute.xlu0 6
    %165 = vperm.xlu0 %164, %v97
    %v166 = vpop.permute.xlu0 %165
    %vm167 = vcmp.eq.s32.totalorder %v166, %v95
    %vm168 = vcmp.eq.s32.totalorder %v166, %v96
    %v169 = vsel %vm167, 1, 0
    %v170 = vsel %vm168, 1, 0
    %v171 = vcvt.s32.f32 %v169
    %v172 = vcvt.s32.f32 %v170
    %v173 = vadd.f32 %v162, %v171
    %v174 = vadd.f32 %v163, %v172
    %175 = vset.pattern.permute.xlu0 7
    %176 = vperm.xlu0 %175, %v97
    %v177 = vpop.permute.xlu0 %176
    %vm178 = vcmp.eq.s32.totalorder %v177, %v95
    %vm179 = vcmp.eq.s32.totalorder %v177, %v96
    %v180 = vsel %vm178, 1, 0
    %v181 = vsel %vm179, 1, 0
    %v182 = vcvt.s32.f32 %v180
    %v183 = vcvt.s32.f32 %v181
    %v184 = vadd.f32 %v173, %v182
    %v185 = vadd.f32 %v174, %v183
    %186 = vset.pattern.permute.xlu0 8
    %187 = vperm.xlu0 %186, %v97
    %v188 = vpop.permute.xlu0 %187
    %vm189 = vcmp.eq.s32.totalorder %v188, %v95
    %vm190 = vcmp.eq.s32.totalorder %v188, %v96
    %v191 = vsel %vm189, 1, 0
    %v192 = vsel %vm190, 1, 0
    %v193 = vcvt.s32.f32 %v191
    %v194 = vcvt.s32.f32 %v192
    %v195 = vadd.f32 %v184, %v193
    %v196 = vadd.f32 %v185, %v194
    %197 = vset.pattern.permute.xlu0 9
    %198 = vperm.xlu0 %197, %v97
    %v199 = vpop.permute.xlu0 %198
    %vm200 = vcmp.eq.s32.totalorder %v199, %v95
    %vm201 = vcmp.eq.s32.totalorder %v199, %v96
    %v202 = vsel %vm200, 1, 0
    %v203 = vsel %vm201, 1, 0
    %v204 = vcvt.s32.f32 %v202
    %v205 = vcvt.s32.f32 %v203
    %v206 = vadd.f32 %v195, %v204
    %v207 = vadd.f32 %v196, %v205
    %208 = vset.pattern.permute.xlu0 10
    %209 = vperm.xlu0 %208, %v97
    %v210 = vpop.permute.xlu0 %209
    %vm211 = vcmp.eq.s32.totalorder %v210, %v95
    %vm212 = vcmp.eq.s32.totalorder %v210, %v96
    %v213 = vsel %vm211, 1, 0
    %v214 = vsel %vm212, 1, 0
    %v215 = vcvt.s32.f32 %v213
    %v216 = vcvt.s32.f32 %v214
    %v217 = vadd.f32 %v206, %v215
    %v218 = vadd.f32 %v207, %v216
    %219 = vset.pattern.permute.xlu0 11
    %220 = vperm.xlu0 %219, %v97
    %v221 = vpop.permute.xlu0 %220
    %vm222 = vcmp.eq.s32.totalorder %v221, %v95
    %vm223 = vcmp.eq.s32.totalorder %v221, %v96
    %v224 = vsel %vm222, 1, 0
    %v225 = vsel %vm223, 1, 0
    %v226 = vcvt.s32.f32 %v224
    %v227 = vcvt.s32.f32 %v225
    %v228 = vadd.f32 %v217, %v226
    %v229 = vadd.f32 %v218, %v227
    %230 = vset.pattern.permute.xlu0 12
    %231 = vperm.xlu0 %230, %v97
    %v232 = vpop.permute.xlu0 %231
    %vm233 = vcmp.eq.s32.totalorder %v232, %v95
    %vm234 = vcmp.eq.s32.totalorder %v232, %v96
    %v235 = vsel %vm233, 1, 0
    %v236 = vsel %vm234, 1, 0
    %v237 = vcvt.s32.f32 %v235
    %v238 = vcvt.s32.f32 %v236
    %v239 = vadd.f32 %v228, %v237
    %v240 = vadd.f32 %v229, %v238
    %241 = vset.pattern.permute.xlu0 13
    %242 = vperm.xlu0 %241, %v97
    %v243 = vpop.permute.xlu0 %242
    %vm244 = vcmp.eq.s32.totalorder %v243, %v95
    %vm245 = vcmp.eq.s32.totalorder %v243, %v96
    %v246 = vsel %vm244, 1, 0
    %v247 = vsel %vm245, 1, 0
    %v248 = vcvt.s32.f32 %v246
    %v249 = vcvt.s32.f32 %v247
    %v250 = vadd.f32 %v239, %v248
    %v251 = vadd.f32 %v240, %v249
    %252 = vset.pattern.permute.xlu0 14
    %253 = vperm.xlu0 %252, %v97
    %v254 = vpop.permute.xlu0 %253
    %vm255 = vcmp.eq.s32.totalorder %v254, %v95
    %vm256 = vcmp.eq.s32.totalorder %v254, %v96
    %v257 = vsel %vm255, 1, 0
    %v258 = vsel %vm256, 1, 0
    %v259 = vcvt.s32.f32 %v257
    %v260 = vcvt.s32.f32 %v258
    %v261 = vadd.f32 %v250, %v259
    %v262 = vadd.f32 %v251, %v260
    %263 = vset.pattern.permute.xlu0 15
    %264 = vperm.xlu0 %263, %v97
    %v265 = vpop.permute.xlu0 %264
    %vm266 = vcmp.eq.s32.totalorder %v265, %v95
    %vm267 = vcmp.eq.s32.totalorder %v265, %v96
    %v268 = vsel %vm266, 1, 0
    %v269 = vsel %vm267, 1, 0
    %v270 = vcvt.s32.f32 %v268
    %v271 = vcvt.s32.f32 %v269
    %v272 = vadd.f32 %v261, %v270
    %v273 = vadd.f32 %v262, %v271
    %v274 = vld [vmem:[#allocation2] sm:$0xff]
    %v275 = vld [vmem:[#allocation6] sm:$0xff]
    %v276 = vld [vmem:[#allocation6 + $0x8] sm:$0xff]
    %v277 = vld [vmem:[#allocation6 + $0x10] sm:$0xff]
    %v278 = vld [vmem:[#allocation6 + $0x18] sm:$0xff]
    %v279 = vld [vmem:[#allocation6 + $0x20] sm:$0xff]
    %v280 = vld [vmem:[#allocation6 + $0x28] sm:$0xff]
    %v281 = vld [vmem:[#allocation6 + $0x30] sm:$0xff]
    %v282 = vld [vmem:[#allocation6 + $0x38] sm:$0xff]
    %v283 = vld [vmem:[#allocation6 + $0x40] sm:$0xff]
    %v284 = vld [vmem:[#allocation6 + $0x48] sm:$0xff]
    %v285 = vld [vmem:[#allocation6 + $0x50] sm:$0xff]
    %v286 = vld [vmem:[#allocation6 + $0x58] sm:$0xff]
    %v287 = vld [vmem:[#allocation6 + $0x60] sm:$0xff]
    %v288 = vld [vmem:[#allocation6 + $0x68] sm:$0xff]
    %v289 = vld [vmem:[#allocation6 + $0x70] sm:$0xff]
    %v290 = vld [vmem:[#allocation6 + $0x78] sm:$0xff]
    %v291 = vld [vmem:[#allocation6 + $0x80] sm:$0xff]
    %v292 = vld [vmem:[#allocation6 + $0x88] sm:$0xff]
    %v293 = vld [vmem:[#allocation6 + $0x90] sm:$0xff]
    %v294 = vld [vmem:[#allocation6 + $0x98] sm:$0xff]
    %v295 = vld [vmem:[#allocation6 + $0xa0] sm:$0xff]
    %v296 = vld [vmem:[#allocation6 + $0xa8] sm:$0xff]
    %v297 = vld [vmem:[#allocation6 + $0xb0] sm:$0xff]
    %v298 = vld [vmem:[#allocation6 + $0xb8] sm:$0xff]
    %v299 = vld [vmem:[#allocation6 + $0xc0] sm:$0xff]
    %v300 = vld [vmem:[#allocation6 + $0xc8] sm:$0xff]
    %v301 = vld [vmem:[#allocation6 + $0xd0] sm:$0xff]
    %v302 = vld [vmem:[#allocation6 + $0xd8] sm:$0xff]
    %v303 = vld [vmem:[#allocation6 + $0xe0] sm:$0xff]
    %v304 = vld [vmem:[#allocation6 + $0xe8] sm:$0xff]
    %v305 = vld [vmem:[#allocation6 + $0xf0] sm:$0xff]
    %v306 = vld [vmem:[#allocation6 + $0xf8] sm:$0xff]
    %307 = vmatpush.msra.mxu0 %v290
    %308 = vmatpush.msra.mxu0 %v289
    %309 = vmatpush.msra.mxu0 %v288
    %310 = vmatpush.msra.mxu0 %v287
    %311 = vmatpush.msra.mxu0 %v286
    %312 = vmatpush.msra.mxu0 %v285
    %313 = vmatpush.msra.mxu0 %v284
    %314 = vmatpush.msra.mxu0 %v283
    %315 = vmatpush.msra.mxu0 %v282
    %316 = vmatpush.msra.mxu0 %v281
    %317 = vmatpush.msra.mxu0 %v280
    %318 = vmatpush.msra.mxu0 %v279
    %319 = vmatpush.msra.mxu0 %v278
    %320 = vmatpush.msra.mxu0 %v277
    %321 = vmatpush.msra.mxu0 %v276
    %322 = vmatpush.msra.mxu0 %v275
    %323 = vmatmul.f32.gmra.mxu0 %v272
    %v324 = vpop.f32.mrf.mxu0
    %v325 = vadd.f32 0.0, %v324
    %326 = vdwg.mxu0
    %327 = vmatpush.msra.mxu0 %v306
    %328 = vmatpush.msra.mxu0 %v305
    %329 = vmatpush.msra.mxu0 %v304
    %330 = vmatpush.msra.mxu0 %v303
    %331 = vmatpush.msra.mxu0 %v302
    %332 = vmatpush.msra.mxu0 %v301
    %333 = vmatpush.msra.mxu0 %v300
    %334 = vmatpush.msra.mxu0 %v299
    %335 = vmatpush.msra.mxu0 %v298
    %336 = vmatpush.msra.mxu0 %v297
    %337 = vmatpush.msra.mxu0 %v296
    %338 = vmatpush.msra.mxu0 %v295
    %339 = vmatpush.msra.mxu0 %v294
    %340 = vmatpush.msra.mxu0 %v293
    %341 = vmatpush.msra.mxu0 %v292
    %342 = vmatpush.msra.mxu0 %v291
    %343 = vmatmul.f32.gmra.mxu0 %v273
    %v344 = vpop.f32.mrf.mxu0
    %v345 = vadd.f32 %v325, %v344
    %346 = vdwg.mxu0
    %v347 = vadd.f32 %v274, %v345
    %348 = vst [vmem:[#allocation2] sm:$0xff] %v347
    // Predicated region
    $region46: #{tpu_custom_call.1} parent=1 // pred_check
      %p349 = pneg %p85
    $region47: #{tpu_custom_call.1} parent=1 // pred_check_branch
      %351 = sbr.rel (%p349) target = $region49
    $region48: #{tpu_custom_call.1} parent=1 // pred_region
      %v352 = vld [vmem:[#allocation2] sm:$0xff]
      %v353 = vmul.f32 %v352, 0.0625
      %v354 = vld [vmem:[#allocation8] sm:$0xff]
      %v355 = vld [vmem:[#allocation8 + $0x8] sm:$0xff]
      %v356 = vld [vmem:[#allocation8 + $0x10] sm:$0xff]
      %v357 = vld [vmem:[#allocation8 + $0x18] sm:$0xff]
      %v358 = vld [vmem:[#allocation8 + $0x20] sm:$0xff]
      %v359 = vld [vmem:[#allocation8 + $0x28] sm:$0xff]
      %v360 = vld [vmem:[#allocation8 + $0x30] sm:$0xff]
      %v361 = vld [vmem:[#allocation8 + $0x38] sm:$0xff]
      %v362 = vld [vmem:[#allocation8 + $0x40] sm:$0xff]
      %v363 = vld [vmem:[#allocation8 + $0x48] sm:$0xff]
      %v364 = vld [vmem:[#allocation8 + $0x50] sm:$0xff]
      %v365 = vld [vmem:[#allocation8 + $0x58] sm:$0xff]
      %v366 = vld [vmem:[#allocation8 + $0x60] sm:$0xff]
      %v367 = vld [vmem:[#allocation8 + $0x68] sm:$0xff]
      %v368 = vld [vmem:[#allocation8 + $0x70] sm:$0xff]
      %v369 = vld [vmem:[#allocation8 + $0x78] sm:$0xff]
      %v370 = vld [vmem:[%s3] sm:$0x1]
      %v372 = vperm.slane %v370, 0
      %374 = vmatpush.msra.mxu0 %v369
      %375 = vmatpush.msra.mxu0 %v368
      %376 = vmatpush.msra.mxu0 %v367
      %377 = vmatpush.msra.mxu0 %v366
      %378 = vmatpush.msra.mxu0 %v365
      %379 = vmatpush.msra.mxu0 %v364
      %380 = vmatpush.msra.mxu0 %v363
      %381 = vmatpush.msra.mxu0 %v362
      %382 = vmatpush.msra.mxu0 %v361
      %383 = vmatpush.msra.mxu0 %v360
      %384 = vmatpush.msra.mxu0 %v359
      %385 = vmatpush.msra.mxu0 %v358
      %386 = vmatpush.msra.mxu0 %v357
      %387 = vmatpush.msra.mxu0 %v356
      %388 = vmatpush.msra.mxu0 %v355
      %389 = vmatpush.msra.mxu0 %v354
      %390 = vmatmul.f32.gmra.mxu0 %v353
      %v391 = vpop.f32.mrf.mxu0
      %v392 = vadd.f32 %v372, %v391
      %393 = vdwg.mxu0
      %v394 = vmax.f32 %v392, 0.0
      %v395 = vld [vmem:[#allocation9] sm:$0xff]
      %v396 = vld [vmem:[#allocation9 + $0x8] sm:$0xff]
      %v397 = vld [vmem:[#allocation9 + $0x10] sm:$0xff]
      %v398 = vld [vmem:[#allocation9 + $0x18] sm:$0xff]
      %v399 = vld [vmem:[#allocation9 + $0x20] sm:$0xff]
      %v400 = vld [vmem:[#allocation9 + $0x28] sm:$0xff]
      %v401 = vld [vmem:[#allocation9 + $0x30] sm:$0xff]
      %v402 = vld [vmem:[#allocation9 + $0x38] sm:$0xff]
      %v403 = vld [vmem:[#allocation9 + $0x40] sm:$0xff]
      %v404 = vld [vmem:[#allocation9 + $0x48] sm:$0xff]
      %v405 = vld [vmem:[#allocation9 + $0x50] sm:$0xff]
      %v406 = vld [vmem:[#allocation9 + $0x58] sm:$0xff]
      %v407 = vld [vmem:[#allocation9 + $0x60] sm:$0xff]
      %v408 = vld [vmem:[#allocation9 + $0x68] sm:$0xff]
      %v409 = vld [vmem:[#allocation9 + $0x70] sm:$0xff]
      %v410 = vld [vmem:[#allocation9 + $0x78] sm:$0xff]
      %v411 = vld [vmem:[%s5] sm:$0x1]
      %v413 = vperm.slane %v411, 0
      %415 = vmatpush.msra.mxu0 %v410
      %416 = vmatpush.msra.mxu0 %v409
      %417 = vmatpush.msra.mxu0 %v408
      %418 = vmatpush.msra.mxu0 %v407
      %419 = vmatpush.msra.mxu0 %v406
      %420 = vmatpush.msra.mxu0 %v405
      %421 = vmatpush.msra.mxu0 %v404
      %422 = vmatpush.msra.mxu0 %v403
      %423 = vmatpush.msra.mxu0 %v402
      %424 = vmatpush.msra.mxu0 %v401
      %425 = vmatpush.msra.mxu0 %v400
      %426 = vmatpush.msra.mxu0 %v399
      %427 = vmatpush.msra.mxu0 %v398
      %428 = vmatpush.msra.mxu0 %v397
      %429 = vmatpush.msra.mxu0 %v396
      %430 = vmatpush.msra.mxu0 %v395
      %431 = vmatmul.f32.gmra.mxu0 %v394
      %v432 = vpop.f32.mrf.mxu0
      %v433 = vadd.f32 %v413, %v432
      %434 = vdwg.mxu0
      %v435 = vmax.f32 %v433, 0.0
      %436 = vst [vmem:[#allocation11] sm:$0xff] %v435
    $region49: #{tpu_custom_call.1} parent=1 // pred_fallthru
      _
    // Predicated region
    $region50: #{tpu_custom_call.1} parent=1 // pred_check
      _
    $region51: #{tpu_custom_call.1} parent=1 // pred_check_branch
      %438 = sbr.rel (0) target = $region53
    $region52: #{tpu_custom_call.1} parent=1 // pred_region
      %440 = vsyncadd [#allocation5], 0
      %s442 = sshll.u32 [#allocation11], 4
      %s443 = int_to_ptr.vmem [resolvable:$true] %s442
      %s444 = sshll.u32 %s6, 4
      %s445 = int_to_ptr.hbm [resolvable:$true] %s444
      %447 = dma.vmem_to_hbm [thread:$0]  %s443, 128, %s445, [#allocation5]
    $region53: #{tpu_custom_call.1} parent=1 // pred_fallthru
      _
    // Predicated region
    $region54: #{tpu_custom_call.1} parent=1 // pred_check
      _
    $region55: #{tpu_custom_call.1} parent=1 // pred_check_branch
      %449 = sbr.rel (0) target = $region57
    $region56: #{tpu_custom_call.1} parent=1 // pred_region
      %451 = dma.done [#allocation5], 128
    $region57: #{tpu_custom_call.1} parent=1 // pred_fallthru
      _
    %452 = vsyncpa [#allocation4], 1
    %453 = vsyncpa [#allocation7], 1
    %454 = vsyncpa [#allocation10], 1
    %455 = vsyncpa [#allocation5], 1

</llo_original>
